<compile_context>
chip_gen: v7x
topology: tpu7x:2x2x1
jax: 0.10.0
libtpu: 0.0.40
codegen_flags: <defaults>
</compile_context>

<pallas_src>
import jax
import jax.numpy as jnp
from jax import lax
from jax.experimental import pallas as pl
from jax.experimental.pallas import tpu as pltpu

NUM_CLASSES = 21  # second Linear output width (fixed in the module)

_VMEM_SPEC = pl.BlockSpec(memory_space=pltpu.MemorySpace.VMEM)


def _vmem_config():
    """Generation-aware (per-block working-set budget, scoped vmem limit)."""
    phys = None
    try:
        phys = getattr(pltpu.get_tpu_info(), "vmem_capacity_bytes", None)
    except Exception:
        phys = None
    if phys is not None and phys >= 96 * 1024 * 1024:
        # v5e / v6e: 128 MiB physical VMEM -> bigger blocks, fewer grid steps.
        return 24 * 1024 * 1024, 64 * 1024 * 1024
    # v7x (64 MiB per TensorCore) or unknown backend: conservative.
    return 8 * 1024 * 1024, 32 * 1024 * 1024


# ---------------------------------------------------------------------------
# Pass 1: Linear(hidden,64) -> ReLU -> Linear(64,21) -> softmax   (tiny, once)
# ---------------------------------------------------------------------------
def _mlp_softmax(f1, w1, b1, w2, b2):
    h = jnp.dot(f1, w1, preferred_element_type=jnp.float32,
                precision=lax.Precision.HIGHEST)
    h = jnp.maximum(h + b1, 0.0)                                  # (B, 64), ReLU
    e = jnp.dot(h, w2, preferred_element_type=jnp.float32,
                precision=lax.Precision.HIGHEST) + b2             # (B, 21)
    e = e - jnp.max(e, axis=-1, keepdims=True)
    p = jnp.exp(e)
    # Exact division (perf review item 7): approx reciprocal saved nothing here
    # and cost accuracy.
    return p / jnp.sum(p, axis=-1, keepdims=True)


def _weights_kernel(f1_ref, w1_ref, b1_ref, w2_ref, b2_ref, w_ref):
    w_ref[...] = _mlp_softmax(f1_ref[...], w1_ref[...], b1_ref[...],
                              w2_ref[...], b2_ref[...]).astype(w_ref.dtype)


def _compute_weights(f1, params, vmem_limit):
    """f1: (B, hidden) f32 -> weights (B, 21) f32. One shot, fully VMEM-resident."""
    w1, b1, w2, b2 = params
    B, _ = f1.shape
    C = w2.shape[1]
    return pl.pallas_call(
        _weights_kernel,
        out_shape=jax.ShapeDtypeStruct((B, C), jnp.float32),
        in_specs=[_VMEM_SPEC] * 5,
        out_specs=_VMEM_SPEC,
        compiler_params=pltpu.CompilerParams(vmem_limit_bytes=vmem_limit),
    )(f1, w1, b1.reshape(1, -1), w2, b2.reshape(1, -1))


# ---------------------------------------------------------------------------
# Fused path for tiny problems: one launch, everything VMEM-resident.
# ---------------------------------------------------------------------------
def _fused_kernel(f1_ref, w1_ref, b1_ref, w2_ref, b2_ref, f2_ref, o_ref, w_ref):
    w = _mlp_softmax(f1_ref[...], w1_ref[...], b1_ref[...],
                     w2_ref[...], b2_ref[...])                    # (B, C)
    w_ref[...] = w.astype(w_ref.dtype)
    o_ref[...] = (f2_ref[...] * w[:, :, None]).astype(o_ref.dtype)


def _fused_forward(f1, f2_flat, params, vmem_limit):
    w1, b1, w2, b2 = params
    B, C, HW = f2_flat.shape
    return pl.pallas_call(
        _fused_kernel,
        out_shape=(jax.ShapeDtypeStruct((B, C, HW), f2_flat.dtype),
                   jax.ShapeDtypeStruct((B, C), jnp.float32)),
        in_specs=[_VMEM_SPEC] * 6,
        out_specs=(_VMEM_SPEC, _VMEM_SPEC),
        compiler_params=pltpu.CompilerParams(vmem_limit_bytes=vmem_limit),
    )(f1, w1, b1.reshape(1, -1), w2, b2.reshape(1, -1), f2_flat)


# ---------------------------------------------------------------------------
# Pass 2: outputs = feature_2 * weights  (HBM-bandwidth bound, 2D tiled)
# ---------------------------------------------------------------------------
def _scale_kernel(w_ref, f2_ref, o_ref):
    # (tr, tc) * (tr, 1): cheap lane broadcast, no in-kernel slicing/relayout.
    o_ref[...] = (f2_ref[...] * w_ref[...]).astype(o_ref.dtype)


def _choose_tiles(R, HW, itemsize, budget):
    """Row/column tiles for the (R=B*C, HW) scale pass.

    Columns: the full dim if it fits, else the largest 128-multiple divisor,
    else a fixed 512-wide tile with a cdiv grid (one masked tail tile) --
    lane-dense unmasked stores on every full tile and bounded VMEM for any H*W.
    Rows: 8-aligned and as large as the double-buffered in+out blocks allow.
    """
    max_tc = 4096 if budget >= 16 * 1024 * 1024 else 2048
    if HW <= max_tc:
        tc = HW                                   # block == full dim, always legal
    else:
        tc = 512
        for cand in (4096, 2048, 1024, 512):
            if cand <= max_tc and HW % cand == 0:
                tc = cand
                break
    # ~2x double-buffering on both the input and output block.
    max_tr = max(8, budget // (4 * tc * itemsize))
    tr = R if R <= max_tr else max(8, (max_tr // 8) * 8)
    return tr, tc


def _scale_features(weights_col, f2_2d, budget, vmem_limit):
    """weights_col: (R, 1) f32; f2_2d: (R, HW) -> (R, HW)."""
    R, HW = f2_2d.shape
    itemsize = jnp.dtype(f2_2d.dtype).itemsize
    tr, tc = _choose_tiles(R, HW, itemsize, budget)
    grid = (pl.cdiv(R, tr), pl.cdiv(HW, tc))

    cost = pl.CostEstimate(
        flops=R * HW,
        transcendentals=0,
        bytes_accessed=2 * R * HW * itemsize + R * 4,
    )
    return pl.pallas_call(
        _scale_kernel,
        out_shape=jax.ShapeDtypeStruct((R, HW), f2_2d.dtype),
        grid=grid,
        in_specs=[
            # Weights: per-block (tr, 1) tile (tiny DMA, broadcast on lanes).
            pl.BlockSpec((tr, 1), lambda i, j: (i, 0)),
            # feature_2: double-buffered (tr, tc) tiles.
            pl.BlockSpec((tr, tc), lambda i, j: (i, j)),
        ],
        out_specs=pl.BlockSpec((tr, tc), lambda i, j: (i, j)),
        compiler_params=pltpu.CompilerParams(
            dimension_semantics=("parallel", "parallel"),
            vmem_limit_bytes=vmem_limit,
        ),
        cost_estimate=cost,
    )(weights_col, f2_2d)


# ---------------------------------------------------------------------------
# Public forward
# ---------------------------------------------------------------------------
def attention_forward(feature_1, feature_2, params, *,
                      fuse_threshold_bytes=256 * 1024):
    """feature_1: (B, 1, hidden_dim) f32
       feature_2: (B, 21, H, W)      f32 (NCHW)
       returns (outputs (B,21,H,W), weights (B,21))."""
    B, _, hidden = feature_1.shape
    _, C, H, W = feature_2.shape
    assert C == NUM_CLASSES
    HW = H * W

    f1 = feature_1.reshape(B, hidden)             # squeeze(1)
    budget, vmem_limit = _vmem_config()
    f2_bytes = feature_2.size * jnp.dtype(feature_2.dtype).itemsize

    if f2_bytes <= fuse_threshold_bytes:
        # Tiny problem: launch-overhead bound -> single fused kernel.
        out_flat, weights = _fused_forward(
            f1, feature_2.reshape(B, C, HW), params, vmem_limit)
        return out_flat.reshape(B, C, H, W), weights

    # General case: tiny MLP+softmax once, then the HBM-bound tiled scale pass.
    weights = _compute_weights(f1, params, vmem_limit)            # (B, 21)
    # Flatten to 2D: rows = B*C (8-aligned tiles, no 21->24 sublane padding),
    # cols = H*W on the lane axis (free contiguous reshape from NCHW).
    f2_2d = feature_2.reshape(B * C, HW)
    w_col = weights.reshape(B * C, 1)
    out_2d = _scale_features(w_col, f2_2d, budget, vmem_limit)
    return out_2d.reshape(B, C, H, W), weights


def init_params(hidden_dim, key):
    """Deterministic init of Linear(hidden,64) and Linear(64,21) params."""
    k1, k2, k3, k4 = jax.random.split(key, 4)
    lim1 = 1.0 / jnp.sqrt(hidden_dim)
    lim2 = 1.0 / jnp.sqrt(64.0)
    # Stored transposed relative to PyTorch (in_features, out_features) so the
    # kernel can do x @ W directly.
    w1 = jax.random.uniform(k1, (hidden_dim, 64), jnp.float32, -lim1, lim1)
    b1 = jax.random.uniform(k2, (64,), jnp.float32, -lim1, lim1)
    w2 = jax.random.uniform(k3, (64, NUM_CLASSES), jnp.float32, -lim2, lim2)
    b2 = jax.random.uniform(k4, (NUM_CLASSES,), jnp.float32, -lim2, lim2)
    return w1, b1, w2, b2


def _reference(feature_1, feature_2, params):
    w1, b1, w2, b2 = params
    h = jnp.maximum(jnp.dot(feature_1, w1, precision=lax.Precision.HIGHEST) + b1, 0.0)
    e = (jnp.dot(h, w2, precision=lax.Precision.HIGHEST) + b2)[:, 0, :]   # squeeze(1)
    w = jax.nn.softmax(e, axis=-1)
    out = feature_2 * w[:, :, None, None]
    return out, w


if __name__ == "__main__":
    key = jax.random.PRNGKey(0)
    k_f1, k_f2, k_p, k_f1b, k_f2b = jax.random.split(key, 5)

    B, hidden_dim, H, W = 2, 32, 8, 8
    params = init_params(hidden_dim, k_p)

    # --- small demo shapes: exercises the fused single-kernel path ---
    feature_1 = jax.random.normal(k_f1, (B, 1, hidden_dim), jnp.float32)
    feature_2 = jax.random.normal(k_f2, (B, NUM_CLASSES, H, W), jnp.float32)

    outputs, weights = attention_forward(feature_1, feature_2, params)
    jax.block_until_ready((outputs, weights))

    ref_out, ref_w = _reference(feature_1, feature_2, params)
    assert outputs.shape == (B, NUM_CLASSES, H, W)
    assert weights.shape == (B, NUM_CLASSES)
    assert jnp.allclose(weights, ref_w, atol=1e-5, rtol=1e-4)
    assert jnp.allclose(outputs, ref_out, atol=1e-5, rtol=1e-4)

    # --- non-128-multiple spatial size: exercises the tiled two-pass path
    #     (cdiv grid with one masked tail tile) ---
    B2, H2, W2 = 2, 65, 65
    feature_1b = jax.random.normal(k_f1b, (B2, 1, hidden_dim), jnp.float32)
    feature_2b = jax.random.normal(k_f2b, (B2, NUM_CLASSES, H2, W2), jnp.float32)
    outputs_b, weights_b = attention_forward(feature_1b, feature_2b, params,
                                             fuse_threshold_bytes=0)
    jax.block_until_ready((outputs_b, weights_b))

    ref_out_b, ref_w_b = _reference(feature_1b, feature_2b, params)
    assert outputs_b.shape == (B2, NUM_CLASSES, H2, W2)
    assert jnp.allclose(weights_b, ref_w_b, atol=1e-5, rtol=1e-4)
    assert jnp.allclose(outputs_b, ref_out_b, atol=1e-5, rtol=1e-4)

    print("KERNEL_OK")
</pallas_src>

<mosaic_0001>
module attributes {stable_mosaic.version = 11 : i64} {
  func.func @_fused_kernel(%arg0: memref<2x32xf32, #tpu.memory_space<vmem>>, %arg1: memref<32x64xf32, #tpu.memory_space<vmem>>, %arg2: memref<1x64xf32, #tpu.memory_space<vmem>>, %arg3: memref<64x21xf32, #tpu.memory_space<vmem>>, %arg4: memref<1x21xf32, #tpu.memory_space<vmem>>, %arg5: memref<2x21x64xf32, #tpu.memory_space<vmem>>, %arg6: memref<2x21x64xf32, #tpu.memory_space<vmem>>, %arg7: memref<2x21xf32, #tpu.memory_space<vmem>>) attributes {dimension_semantics = [], scalar_prefetch = 0 : i64, scratch_operands = 0 : i64, tpu.core_type = #tpu.core_type<tc>} {
    %c0 = arith.constant 0 : index
    %c0_0 = arith.constant 0 : index
    %0 = vector.load %arg0[%c0, %c0_0] : memref<2x32xf32, #tpu.memory_space<vmem>>, vector<2x32xf32>
    %c0_1 = arith.constant 0 : index
    %c0_2 = arith.constant 0 : index
    %1 = vector.load %arg1[%c0_1, %c0_2] : memref<32x64xf32, #tpu.memory_space<vmem>>, vector<32x64xf32>
    %c0_3 = arith.constant 0 : index
    %c0_4 = arith.constant 0 : index
    %2 = vector.load %arg2[%c0_3, %c0_4] : memref<1x64xf32, #tpu.memory_space<vmem>>, vector<1x64xf32>
    %c0_5 = arith.constant 0 : index
    %c0_6 = arith.constant 0 : index
    %3 = vector.load %arg3[%c0_5, %c0_6] : memref<64x21xf32, #tpu.memory_space<vmem>>, vector<64x21xf32>
    %c0_7 = arith.constant 0 : index
    %c0_8 = arith.constant 0 : index
    %4 = vector.load %arg4[%c0_7, %c0_8] : memref<1x21xf32, #tpu.memory_space<vmem>>, vector<1x21xf32>
    %cst = arith.constant dense<0.000000e+00> : vector<2x64xf32>
    %5 = tpu.matmul %0, %1, %cst {dimension_numbers = #tpu.dot_dimension_numbers<[1], [0], [0], [1], [0, 0, 1, 1], [], []>, precision = #tpu.contract_precision<fp32>} : vector<2x32xf32>, vector<32x64xf32>, vector<2x64xf32> -> vector<2x64xf32>
    %6 = vector.broadcast %2 : vector<1x64xf32> to vector<2x64xf32>
    %7 = arith.addf %5, %6 : vector<2x64xf32>
    %cst_9 = arith.constant 0.000000e+00 : f32
    %8 = vector.broadcast %cst_9 : f32 to vector<2x64xf32>
    %9 = arith.maximumf %7, %8 : vector<2x64xf32>
    %cst_10 = arith.constant dense<0.000000e+00> : vector<2x21xf32>
    %10 = tpu.matmul %9, %3, %cst_10 {dimension_numbers = #tpu.dot_dimension_numbers<[1], [0], [0], [1], [0, 0, 1, 1], [], []>, precision = #tpu.contract_precision<fp32>} : vector<2x64xf32>, vector<64x21xf32>, vector<2x21xf32> -> vector<2x21xf32>
    %11 = vector.broadcast %4 : vector<1x21xf32> to vector<2x21xf32>
    %12 = arith.addf %10, %11 : vector<2x21xf32>
    %cst_11 = arith.constant dense<0xFF800000> : vector<2xf32>
    %13 = vector.multi_reduction <maximumf>, %12, %cst_11 [1] : vector<2x21xf32> to vector<2xf32>
    %14 = vector.shape_cast %13 : vector<2xf32> to vector<2x1xf32>
    %15 = vector.broadcast %14 : vector<2x1xf32> to vector<2x21xf32>
    %16 = arith.subf %12, %15 : vector<2x21xf32>
    %17 = math.exp %16 : vector<2x21xf32>
    %cst_12 = arith.constant dense<0.000000e+00> : vector<2xf32>
    %18 = vector.multi_reduction <add>, %17, %cst_12 [1] : vector<2x21xf32> to vector<2xf32>
    %19 = vector.shape_cast %18 : vector<2xf32> to vector<2x1xf32>
    %20 = vector.broadcast %19 : vector<2x1xf32> to vector<2x21xf32>
    %21 = arith.divf %17, %20 : vector<2x21xf32>
    %c0_13 = arith.constant 0 : index
    %c0_14 = arith.constant 0 : index
    %22 = vector.load %arg7[%c0_13, %c0_14] : memref<2x21xf32, #tpu.memory_space<vmem>>, vector<2x21xf32>
    tpu.vector_store %arg7[%c0_13, %c0_14], %21 {strides = array<i32>} : memref<2x21xf32, #tpu.memory_space<vmem>>, vector<2x21xf32>,
    %c0_15 = arith.constant 0 : index
    %c0_16 = arith.constant 0 : index
    %c0_17 = arith.constant 0 : index
    %23 = vector.load %arg5[%c0_15, %c0_16, %c0_17] : memref<2x21x64xf32, #tpu.memory_space<vmem>>, vector<2x21x64xf32>
    %24 = vector.shape_cast %21 : vector<2x21xf32> to vector<2x21x1xf32>
    %25 = vector.broadcast %24 : vector<2x21x1xf32> to vector<2x21x64xf32>
    %26 = arith.mulf %23, %25 : vector<2x21x64xf32>
    %c0_18 = arith.constant 0 : index
    %c0_19 = arith.constant 0 : index
    %c0_20 = arith.constant 0 : index
    %27 = vector.load %arg6[%c0_18, %c0_19, %c0_20] : memref<2x21x64xf32, #tpu.memory_space<vmem>>, vector<2x21x64xf32>
    tpu.vector_store %arg6[%c0_18, %c0_19, %c0_20], %26 {strides = array<i32>} : memref<2x21x64xf32, #tpu.memory_space<vmem>>, vector<2x21x64xf32>,
    return
  }
}

</mosaic_0001>

<llo_original>
// kernel: tpu_custom_call.1
$region0: #{tpu_custom_call.1}
  #allocation0 [shape = 'u32[]', space=smem, size = 0x4, offset = 0x4, fixed_abs, tag = 'smem constant byte address 0x4 - core index']
  #allocation1 [shape = 'u32[144,128]{1,0:T(1,128)}', space=vmem, size = 0x12000, scoped, tag = 'internal scratch']
  %s0 = inlined_call_operand.vmem [shape: f32[2,32], index: 0, kind: input, shape index: {}]
  %s1 = inlined_call_operand.vmem [shape: f32[32,64], index: 1, kind: input, shape index: {}]
  %s2 = inlined_call_operand.vmem [shape: f32[1,64], index: 2, kind: input, shape index: {}]
  %s3 = inlined_call_operand.vmem [shape: f32[64,21], index: 3, kind: input, shape index: {}]
  %s4 = inlined_call_operand.vmem [shape: f32[1,21], index: 4, kind: input, shape index: {}]
  %s5 = inlined_call_operand.vmem [shape: f32[2,21,64], index: 5, kind: input, shape index: {}]
  %s6 = inlined_call_operand.vmem [shape: f32[2,21,64], index: 6, kind: output, shape index: {0}]
  %s7 = inlined_call_operand.hbm [shape: f32[2,21], index: 7, kind: output, shape index: {1}]
  %8 = xla_tuple %s6, %s7
  %s9 = sld [smem:[#allocation0]]
  $region42: #{tpu_custom_call.1} parent=0
    _
  %s11 = ssub.s32 1, %s9
  %s12 = scalar_select 0, %s11, %s9
  $region1: #{tpu_custom_call.1} parent=0
    #allocation2 [shape = 'u8[1024]{0}', space=vmem, size = 0x400, scoped, tag = 'output window, operand 1, single buffered']
    #allocation3 [shape = 's32[1]{0}', space=sflag, size = 0x4, scoped, tag = 'scoped memory for tpu_custom_call.1']
    %13 = vsyncpa [#allocation3], 0
    // Predicated region
    $region2: #{tpu_custom_call.1} parent=1 // pred_check
      _
    $region3: #{tpu_custom_call.1} parent=1 // pred_check_branch
      %15 = sbr.rel (0) target = $region5
    $region4: #{tpu_custom_call.1} parent=1 // pred_region
      _
    $region5: #{tpu_custom_call.1} parent=1 // pred_fallthru
      _
    // Predicated region
    $region6: #{tpu_custom_call.1} parent=1 // pred_check
      _
    $region7: #{tpu_custom_call.1} parent=1 // pred_check_branch
      %17 = sbr.rel (0) target = $region9
    $region8: #{tpu_custom_call.1} parent=1 // pred_region
      _
    $region9: #{tpu_custom_call.1} parent=1 // pred_fallthru
      _
    // Predicated region
    $region10: #{tpu_custom_call.1} parent=1 // pred_check
      _
    $region11: #{tpu_custom_call.1} parent=1 // pred_check_branch
      %19 = sbr.rel (0) target = $region13
    $region12: #{tpu_custom_call.1} parent=1 // pred_region
      _
    $region13: #{tpu_custom_call.1} parent=1 // pred_fallthru
      _
    // Predicated region
    $region14: #{tpu_custom_call.1} parent=1 // pred_check
      _
    $region15: #{tpu_custom_call.1} parent=1 // pred_check_branch
      %21 = sbr.rel (0) target = $region17
    $region16: #{tpu_custom_call.1} parent=1 // pred_region
      _
    $region17: #{tpu_custom_call.1} parent=1 // pred_fallthru
      _
    // Predicated region
    $region18: #{tpu_custom_call.1} parent=1 // pred_check
      _
    $region19: #{tpu_custom_call.1} parent=1 // pred_check_branch
      %23 = sbr.rel (0) target = $region21
    $region20: #{tpu_custom_call.1} parent=1 // pred_region
      _
    $region21: #{tpu_custom_call.1} parent=1 // pred_fallthru
      _
    // Predicated region
    $region22: #{tpu_custom_call.1} parent=1 // pred_check
      _
    $region23: #{tpu_custom_call.1} parent=1 // pred_check_branch
      %25 = sbr.rel (0) target = $region25
    $region24: #{tpu_custom_call.1} parent=1 // pred_region
      _
    $region25: #{tpu_custom_call.1} parent=1 // pred_fallthru
      _
    %v26 = vld [vmem:[%s0] sm:$0x3]
    %v27 = vld [vmem:[%s1] sm:$0xff]
    %v28 = vld [vmem:[%s1 + $0x8] sm:$0xff]
    %v29 = vld [vmem:[%s1 + $0x10] sm:$0xff]
    %v30 = vld [vmem:[%s1 + $0x18] sm:$0xff]
    %v31 = vld [vmem:[%s2] sm:$0x1]
    %v32 = vld [vmem:[%s3] sm:$0xff]
    %v33 = vld [vmem:[%s3 + $0x8] sm:$0xff]
    %v34 = vld [vmem:[%s3 + $0x10] sm:$0xff]
    %v35 = vld [vmem:[%s3 + $0x18] sm:$0xff]
    %v36 = vld [vmem:[%s3 + $0x20] sm:$0xff]
    %v37 = vld [vmem:[%s3 + $0x28] sm:$0xff]
    %v38 = vld [vmem:[%s3 + $0x30] sm:$0xff]
    %v39 = vld [vmem:[%s3 + $0x38] sm:$0xff]
    %v40 = vld [vmem:[%s4] sm:$0x1]
    %v42 = vlaneseq
    %v43 = vshrl.u32 %v42, 7
    %v44 = vsub.s32 0, %v43
    %v45 = vrot.slane %v31, %v44
    %vm47 = vcmask 261120
    %v49 = vsel %vm47, %v26, 0
    %51 = vmatprep.subr.mxu0 0.0
    %v52 = vand.u32 %v27, 4294901760
    %53 = vmatpush1.msra.mxu0 %v52
    %54 = vmatprep.subr.mxu0 0.0
    %v55 = vand.u32 %v28, 4294901760
    %56 = vmatpush1.msra.mxu0 %v55
    %57 = vmatprep.subr.mxu0 0.0
    %v58 = vand.u32 %v29, 4294901760
    %59 = vmatpush1.msra.mxu0 %v58
    %60 = vmatprep.subr.mxu0 0.0
    %v61 = vand.u32 %v30, 4294901760
    %62 = vmatpush1.msra.mxu0 %v61
    %63 = vmatprep.subr.mxu0 0.0
    %64 = vmatpush1.msra.mxu0 0.0
    %65 = vmatprep.subr.mxu0 0.0
    %66 = vmatpush1.msra.mxu0 0.0
    %67 = vmatprep.subr.mxu0 0.0
    %68 = vmatpush1.msra.mxu0 0.0
    %69 = vmatprep.subr.mxu0 0.0
    %70 = vmatpush1.msra.mxu0 0.0
    %71 = vmatprep.subr.mxu0 0.0
    %72 = vmatpush1.msra.mxu0 0.0
    %73 = vmatprep.subr.mxu0 0.0
    %74 = vmatpush1.msra.mxu0 0.0
    %75 = vmatprep.subr.mxu0 0.0
    %76 = vmatpush1.msra.mxu0 0.0
    %77 = vmatprep.subr.mxu0 0.0
    %78 = vmatpush1.msra.mxu0 0.0
    %79 = vmatprep.subr.mxu0 0.0
    %80 = vmatpush1.msra.mxu0 0.0
    %81 = vmatprep.subr.mxu0 0.0
    %82 = vmatpush1.msra.mxu0 0.0
    %83 = vmatprep.subr.mxu0 0.0
    %84 = vmatpush1.msra.mxu0 0.0
    %85 = vmatprep.subr.mxu0 0.0
    %86 = vmatpush1.msra.mxu0 0.0
    %87 = vmatprep.subr.mxu0 0.0
    %88 = vmatpush1.msra.mxu0 0.0
    %89 = vmatprep.subr.mxu0 0.0
    %90 = vmatpush1.msra.mxu0 0.0
    %91 = vmatprep.subr.mxu0 0.0
    %92 = vmatpush1.msra.mxu0 0.0
    %93 = vmatprep.subr.mxu0 0.0
    %94 = vmatpush1.msra.mxu0 0.0
    %95 = vmatprep.subr.mxu0 0.0
    %96 = vmatpush1.msra.mxu0 0.0
    %97 = vmatprep.subr.mxu0 0.0
    %98 = vmatpush1.msra.mxu0 0.0
    %99 = vmatprep.subr.mxu0 0.0
    %100 = vmatpush1.msra.mxu0 0.0
    %101 = vmatprep.subr.mxu0 0.0
    %102 = vmatpush1.msra.mxu0 0.0
    %103 = vmatprep.subr.mxu0 0.0
    %104 = vmatpush1.msra.mxu0 0.0
    %105 = vmatprep.subr.mxu0 0.0
    %106 = vmatpush1.msra.mxu0 0.0
    %107 = vmatprep.subr.mxu0 0.0
    %108 = vmatpush1.msra.mxu0 0.0
    %109 = vmatprep.subr.mxu0 0.0
    %110 = vmatpush1.msra.mxu0 0.0
    %111 = vmatprep.subr.mxu0 0.0
    %112 = vmatpush1.msra.mxu0 0.0
    %113 = vmatprep.subr.mxu0 0.0
    %114 = vmatpush1.msra.mxu0 0.0
    %115 = vmatprep.subr.mxu0 0.0
    %116 = vmatpush1.msra.mxu0 0.0
    %117 = vmatprep.subr.mxu0 0.0
    %118 = vmatpush1.msra.mxu0 0.0
    %119 = vmatprep.mubr.f32.mxu0 0.0
    %v120 = vand.u32 %v49, 4294901760
    %v121 = vsub.f32 %v49, %v120
    %v122 = vand.u32 %v121, 4294901760
    %v123 = vsub.f32 %v121, %v122
    %v124 = vand.u32 %v123, 4294901760
    %125 = vmatmul.mubr.f32.gmra.mrb[0].mxu0 %v124
    %v126 = vpop.f32.mrb[0].mxu0
    %v127 = vadd.f32 %v45, %v126
    %v128 = vpop.f32.mrb[0].mxu0
    %129 = vdwg.mxu0
    %130 = vmatprep.subr.mxu0 0.0
    %v131 = vand.u32 %v27, 4294901760
    %v132 = vsub.f32 %v27, %v131
    %v133 = vand.u32 %v132, 4294901760
    %v134 = vsub.f32 %v132, %v133
    %v135 = vand.u32 %v134, 4294901760
    %136 = vmatpush1.msra.mxu0 %v135
    %137 = vmatprep.subr.mxu0 0.0
    %v138 = vand.u32 %v28, 4294901760
    %v139 = vsub.f32 %v28, %v138
    %v140 = vand.u32 %v139, 4294901760
    %v141 = vsub.f32 %v139, %v140
    %v142 = vand.u32 %v141, 4294901760
    %143 = vmatpush1.msra.mxu0 %v142
    %144 = vmatprep.subr.mxu0 0.0
    %v145 = vand.u32 %v29, 4294901760
    %v146 = vsub.f32 %v29, %v145
    %v147 = vand.u32 %v146, 4294901760
    %v148 = vsub.f32 %v146, %v147
    %v149 = vand.u32 %v148, 4294901760
    %150 = vmatpush1.msra.mxu0 %v149
    %151 = vmatprep.subr.mxu0 0.0
    %v152 = vand.u32 %v30, 4294901760
    %v153 = vsub.f32 %v30, %v152
    %v154 = vand.u32 %v153, 4294901760
    %v155 = vsub.f32 %v153, %v154
    %v156 = vand.u32 %v155, 4294901760
    %157 = vmatpush1.msra.mxu0 %v156
    %158 = vmatprep.subr.mxu0 0.0
    %159 = vmatpush1.msra.mxu0 0.0
    %160 = vmatprep.subr.mxu0 0.0
    %161 = vmatpush1.msra.mxu0 0.0
    %162 = vmatprep.subr.mxu0 0.0
    %163 = vmatpush1.msra.mxu0 0.0
    %164 = vmatprep.subr.mxu0 0.0
    %165 = vmatpush1.msra.mxu0 0.0
    %166 = vmatprep.subr.mxu0 0.0
    %167 = vmatpush1.msra.mxu0 0.0
    %168 = vmatprep.subr.mxu0 0.0
    %169 = vmatpush1.msra.mxu0 0.0
    %170 = vmatprep.subr.mxu0 0.0
    %171 = vmatpush1.msra.mxu0 0.0
    %172 = vmatprep.subr.mxu0 0.0
    %173 = vmatpush1.msra.mxu0 0.0
    %174 = vmatprep.subr.mxu0 0.0
    %175 = vmatpush1.msra.mxu0 0.0
    %176 = vmatprep.subr.mxu0 0.0
    %177 = vmatpush1.msra.mxu0 0.0
    %178 = vmatprep.subr.mxu0 0.0
    %179 = vmatpush1.msra.mxu0 0.0
    %180 = vmatprep.subr.mxu0 0.0
    %181 = vmatpush1.msra.mxu0 0.0
    %182 = vmatprep.subr.mxu0 0.0
    %183 = vmatpush1.msra.mxu0 0.0
    %184 = vmatprep.subr.mxu0 0.0
    %185 = vmatpush1.msra.mxu0 0.0
    %186 = vmatprep.subr.mxu0 0.0
    %187 = vmatpush1.msra.mxu0 0.0
    %188 = vmatprep.subr.mxu0 0.0
    %189 = vmatpush1.msra.mxu0 0.0
    %190 = vmatprep.subr.mxu0 0.0
    %191 = vmatpush1.msra.mxu0 0.0
    %192 = vmatprep.subr.mxu0 0.0
    %193 = vmatpush1.msra.mxu0 0.0
    %194 = vmatprep.subr.mxu0 0.0
    %195 = vmatpush1.msra.mxu0 0.0
    %196 = vmatprep.subr.mxu0 0.0
    %197 = vmatpush1.msra.mxu0 0.0
    %198 = vmatprep.subr.mxu0 0.0
    %199 = vmatpush1.msra.mxu0 0.0
    %200 = vmatprep.subr.mxu0 0.0
    %201 = vmatpush1.msra.mxu0 0.0
    %202 = vmatprep.subr.mxu0 0.0
    %203 = vmatpush1.msra.mxu0 0.0
    %204 = vmatprep.subr.mxu0 0.0
    %205 = vmatpush1.msra.mxu0 0.0
    %206 = vmatprep.subr.mxu0 0.0
    %207 = vmatpush1.msra.mxu0 0.0
    %208 = vmatprep.subr.mxu0 0.0
    %209 = vmatpush1.msra.mxu0 0.0
    %210 = vmatprep.subr.mxu0 0.0
    %211 = vmatpush1.msra.mxu0 0.0
    %212 = vmatprep.subr.mxu0 0.0
    %213 = vmatpush1.msra.mxu0 0.0
    %214 = vmatprep.mubr.f32.mxu0 0.0
    %v215 = vand.u32 %v49, 4294901760
    %216 = vmatmul.mubr.f32.gmra.mrb[0].mxu0 %v215
    %v217 = vpop.f32.mrb[0].mxu0
    %v218 = vadd.f32 %v127, %v217
    %v219 = vpop.f32.mrb[0].mxu0
    %220 = vdwg.mxu0
    %221 = vmatprep.subr.mxu0 0.0
    %v222 = vand.u32 %v27, 4294901760
    %v223 = vsub.f32 %v27, %v222
    %224 = vmatpush1.msra.mxu0 %v223
    %225 = vmatprep.subr.mxu0 0.0
    %v226 = vand.u32 %v28, 4294901760
    %v227 = vsub.f32 %v28, %v226
    %228 = vmatpush1.msra.mxu0 %v227
    %229 = vmatprep.subr.mxu0 0.0
    %v230 = vand.u32 %v29, 4294901760
    %v231 = vsub.f32 %v29, %v230
    %232 = vmatpush1.msra.mxu0 %v231
    %233 = vmatprep.subr.mxu0 0.0
    %v234 = vand.u32 %v30, 4294901760
    %v235 = vsub.f32 %v30, %v234
    %236 = vmatpush1.msra.mxu0 %v235
    %237 = vmatprep.subr.mxu0 0.0
    %238 = vmatpush1.msra.mxu0 0.0
    %239 = vmatprep.subr.mxu0 0.0
    %240 = vmatpush1.msra.mxu0 0.0
    %241 = vmatprep.subr.mxu0 0.0
    %242 = vmatpush1.msra.mxu0 0.0
    %243 = vmatprep.subr.mxu0 0.0
    %244 = vmatpush1.msra.mxu0 0.0
    %245 = vmatprep.subr.mxu0 0.0
    %246 = vmatpush1.msra.mxu0 0.0
    %247 = vmatprep.subr.mxu0 0.0
    %248 = vmatpush1.msra.mxu0 0.0
    %249 = vmatprep.subr.mxu0 0.0
    %250 = vmatpush1.msra.mxu0 0.0
    %251 = vmatprep.subr.mxu0 0.0
    %252 = vmatpush1.msra.mxu0 0.0
    %253 = vmatprep.subr.mxu0 0.0
    %254 = vmatpush1.msra.mxu0 0.0
    %255 = vmatprep.subr.mxu0 0.0
    %256 = vmatpush1.msra.mxu0 0.0
    %257 = vmatprep.subr.mxu0 0.0
    %258 = vmatpush1.msra.mxu0 0.0
    %259 = vmatprep.subr.mxu0 0.0
    %260 = vmatpush1.msra.mxu0 0.0
    %261 = vmatprep.subr.mxu0 0.0
    %262 = vmatpush1.msra.mxu0 0.0
    %263 = vmatprep.subr.mxu0 0.0
    %264 = vmatpush1.msra.mxu0 0.0
    %265 = vmatprep.subr.mxu0 0.0
    %266 = vmatpush1.msra.mxu0 0.0
    %267 = vmatprep.subr.mxu0 0.0
    %268 = vmatpush1.msra.mxu0 0.0
    %269 = vmatprep.subr.mxu0 0.0
    %270 = vmatpush1.msra.mxu0 0.0
    %271 = vmatprep.subr.mxu0 0.0
    %272 = vmatpush1.msra.mxu0 0.0
    %273 = vmatprep.subr.mxu0 0.0
    %274 = vmatpush1.msra.mxu0 0.0
    %275 = vmatprep.subr.mxu0 0.0
    %276 = vmatpush1.msra.mxu0 0.0
    %277 = vmatprep.subr.mxu0 0.0
    %278 = vmatpush1.msra.mxu0 0.0
    %279 = vmatprep.subr.mxu0 0.0
    %280 = vmatpush1.msra.mxu0 0.0
    %281 = vmatprep.subr.mxu0 0.0
    %282 = vmatpush1.msra.mxu0 0.0
    %283 = vmatprep.subr.mxu0 0.0
    %284 = vmatpush1.msra.mxu0 0.0
    %285 = vmatprep.subr.mxu0 0.0
    %286 = vmatpush1.msra.mxu0 0.0
    %287 = vmatprep.subr.mxu0 0.0
    %288 = vmatpush1.msra.mxu0 0.0
    %289 = vmatprep.subr.mxu0 0.0
    %290 = vmatpush1.msra.mxu0 0.0
    %291 = vmatprep.subr.mxu0 0.0
    %292 = vmatpush1.msra.mxu0 0.0
    %293 = vmatprep.mubr.f32.mxu0 0.0
    %v294 = vand.u32 %v49, 4294901760
    %v295 = vsub.f32 %v49, %v294
    %296 = vmatmul.mubr.f32.gmra.mrb[0].mxu0 %v295
    %v297 = vpop.f32.mrb[0].mxu0
    %v298 = vadd.f32 %v218, %v297
    %v299 = vpop.f32.mrb[0].mxu0
    %300 = vdwg.mxu0
    %301 = vmatprep.subr.mxu0 0.0
    %v302 = vand.u32 %v27, 4294901760
    %303 = vmatpush1.msra.mxu0 %v302
    %304 = vmatprep.subr.mxu0 0.0
    %v305 = vand.u32 %v28, 4294901760
    %306 = vmatpush1.msra.mxu0 %v305
    %307 = vmatprep.subr.mxu0 0.0
    %v308 = vand.u32 %v29, 4294901760
    %309 = vmatpush1.msra.mxu0 %v308
    %310 = vmatprep.subr.mxu0 0.0
    %v311 = vand.u32 %v30, 4294901760
    %312 = vmatpush1.msra.mxu0 %v311
    %313 = vmatprep.subr.mxu0 0.0
    %314 = vmatpush1.msra.mxu0 0.0
    %315 = vmatprep.subr.mxu0 0.0
    %316 = vmatpush1.msra.mxu0 0.0
    %317 = vmatprep.subr.mxu0 0.0
    %318 = vmatpush1.msra.mxu0 0.0
    %319 = vmatprep.subr.mxu0 0.0
    %320 = vmatpush1.msra.mxu0 0.0
    %321 = vmatprep.subr.mxu0 0.0
    %322 = vmatpush1.msra.mxu0 0.0
    %323 = vmatprep.subr.mxu0 0.0
    %324 = vmatpush1.msra.mxu0 0.0
    %325 = vmatprep.subr.mxu0 0.0
    %326 = vmatpush1.msra.mxu0 0.0
    %327 = vmatprep.subr.mxu0 0.0
    %328 = vmatpush1.msra.mxu0 0.0
    %329 = vmatprep.subr.mxu0 0.0
    %330 = vmatpush1.msra.mxu0 0.0
    %331 = vmatprep.subr.mxu0 0.0
    %332 = vmatpush1.msra.mxu0 0.0
    %333 = vmatprep.subr.mxu0 0.0
    %334 = vmatpush1.msra.mxu0 0.0
    %335 = vmatprep.subr.mxu0 0.0
    %336 = vmatpush1.msra.mxu0 0.0
    %337 = vmatprep.subr.mxu0 0.0
    %338 = vmatpush1.msra.mxu0 0.0
    %339 = vmatprep.subr.mxu0 0.0
    %340 = vmatpush1.msra.mxu0 0.0
    %341 = vmatprep.subr.mxu0 0.0
    %342 = vmatpush1.msra.mxu0 0.0
    %343 = vmatprep.subr.mxu0 0.0
    %344 = vmatpush1.msra.mxu0 0.0
    %345 = vmatprep.subr.mxu0 0.0
    %346 = vmatpush1.msra.mxu0 0.0
    %347 = vmatprep.subr.mxu0 0.0
    %348 = vmatpush1.msra.mxu0 0.0
    %349 = vmatprep.subr.mxu0 0.0
    %350 = vmatpush1.msra.mxu0 0.0
    %351 = vmatprep.subr.mxu0 0.0
    %352 = vmatpush1.msra.mxu0 0.0
    %353 = vmatprep.subr.mxu0 0.0
    %354 = vmatpush1.msra.mxu0 0.0
    %355 = vmatprep.subr.mxu0 0.0
    %356 = vmatpush1.msra.mxu0 0.0
    %357 = vmatprep.subr.mxu0 0.0
    %358 = vmatpush1.msra.mxu0 0.0
    %359 = vmatprep.subr.mxu0 0.0
    %360 = vmatpush1.msra.mxu0 0.0
    %361 = vmatprep.subr.mxu0 0.0
    %362 = vmatpush1.msra.mxu0 0.0
    %363 = vmatprep.subr.mxu0 0.0
    %364 = vmatpush1.msra.mxu0 0.0
    %365 = vmatprep.subr.mxu0 0.0
    %366 = vmatpush1.msra.mxu0 0.0
    %367 = vmatprep.subr.mxu0 0.0
    %368 = vmatpush1.msra.mxu0 0.0
    %369 = vmatprep.mubr.f32.mxu0 0.0
    %v370 = vand.u32 %v49, 4294901760
    %v371 = vsub.f32 %v49, %v370
    %v372 = vand.u32 %v371, 4294901760
    %373 = vmatmul.mubr.f32.gmra.mrb[0].mxu0 %v372
    %v374 = vpop.f32.mrb[0].mxu0
    %v375 = vadd.f32 %v298, %v374
    %v376 = vpop.f32.mrb[0].mxu0
    %377 = vdwg.mxu0
    %378 = vmatprep.subr.mxu0 0.0
    %v379 = vand.u32 %v27, 4294901760
    %v380 = vsub.f32 %v27, %v379
    %v381 = vand.u32 %v380, 4294901760
    %382 = vmatpush1.msra.mxu0 %v381
    %383 = vmatprep.subr.mxu0 0.0
    %v384 = vand.u32 %v28, 4294901760
    %v385 = vsub.f32 %v28, %v384
    %v386 = vand.u32 %v385, 4294901760
    %387 = vmatpush1.msra.mxu0 %v386
    %388 = vmatprep.subr.mxu0 0.0
    %v389 = vand.u32 %v29, 4294901760
    %v390 = vsub.f32 %v29, %v389
    %v391 = vand.u32 %v390, 4294901760
    %392 = vmatpush1.msra.mxu0 %v391
    %393 = vmatprep.subr.mxu0 0.0
    %v394 = vand.u32 %v30, 4294901760
    %v395 = vsub.f32 %v30, %v394
    %v396 = vand.u32 %v395, 4294901760
    %397 = vmatpush1.msra.mxu0 %v396
    %398 = vmatprep.subr.mxu0 0.0
    %399 = vmatpush1.msra.mxu0 0.0
    %400 = vmatprep.subr.mxu0 0.0
    %401 = vmatpush1.msra.mxu0 0.0
    %402 = vmatprep.subr.mxu0 0.0
    %403 = vmatpush1.msra.mxu0 0.0
    %404 = vmatprep.subr.mxu0 0.0
    %405 = vmatpush1.msra.mxu0 0.0
    %406 = vmatprep.subr.mxu0 0.0
    %407 = vmatpush1.msra.mxu0 0.0
    %408 = vmatprep.subr.mxu0 0.0
    %409 = vmatpush1.msra.mxu0 0.0
    %410 = vmatprep.subr.mxu0 0.0
    %411 = vmatpush1.msra.mxu0 0.0
    %412 = vmatprep.subr.mxu0 0.0
    %413 = vmatpush1.msra.mxu0 0.0
    %414 = vmatprep.subr.mxu0 0.0
    %415 = vmatpush1.msra.mxu0 0.0
    %416 = vmatprep.subr.mxu0 0.0
    %417 = vmatpush1.msra.mxu0 0.0
    %418 = vmatprep.subr.mxu0 0.0
    %419 = vmatpush1.msra.mxu0 0.0
    %420 = vmatprep.subr.mxu0 0.0
    %421 = vmatpush1.msra.mxu0 0.0
    %422 = vmatprep.subr.mxu0 0.0
    %423 = vmatpush1.msra.mxu0 0.0
    %424 = vmatprep.subr.mxu0 0.0
    %425 = vmatpush1.msra.mxu0 0.0
    %426 = vmatprep.subr.mxu0 0.0
    %427 = vmatpush1.msra.mxu0 0.0
    %428 = vmatprep.subr.mxu0 0.0
    %429 = vmatpush1.msra.mxu0 0.0
    %430 = vmatprep.subr.mxu0 0.0
    %431 = vmatpush1.msra.mxu0 0.0
    %432 = vmatprep.subr.mxu0 0.0
    %433 = vmatpush1.msra.mxu0 0.0
    %434 = vmatprep.subr.mxu0 0.0
    %435 = vmatpush1.msra.mxu0 0.0
    %436 = vmatprep.subr.mxu0 0.0
    %437 = vmatpush1.msra.mxu0 0.0
    %438 = vmatprep.subr.mxu0 0.0
    %439 = vmatpush1.msra.mxu0 0.0
    %440 = vmatprep.subr.mxu0 0.0
    %441 = vmatpush1.msra.mxu0 0.0
    %442 = vmatprep.subr.mxu0 0.0
    %443 = vmatpush1.msra.mxu0 0.0
    %444 = vmatprep.subr.mxu0 0.0
    %445 = vmatpush1.msra.mxu0 0.0
    %446 = vmatprep.subr.mxu0 0.0
    %447 = vmatpush1.msra.mxu0 0.0
    %448 = vmatprep.subr.mxu0 0.0
    %449 = vmatpush1.msra.mxu0 0.0
    %450 = vmatprep.subr.mxu0 0.0
    %451 = vmatpush1.msra.mxu0 0.0
    %452 = vmatprep.subr.mxu0 0.0
    %453 = vmatpush1.msra.mxu0 0.0
    %454 = vmatprep.mubr.f32.mxu0 0.0
    %v455 = vand.u32 %v49, 4294901760
    %456 = vmatmul.mubr.f32.gmra.mrb[0].mxu0 %v455
    %v457 = vpop.f32.mrb[0].mxu0
    %v458 = vadd.f32 %v375, %v457
    %v459 = vpop.f32.mrb[0].mxu0
    %460 = vdwg.mxu0
    %461 = vmatprep.subr.mxu0 0.0
    %v462 = vand.u32 %v27, 4294901760
    %463 = vmatpush1.msra.mxu0 %v462
    %464 = vmatprep.subr.mxu0 0.0
    %v465 = vand.u32 %v28, 4294901760
    %466 = vmatpush1.msra.mxu0 %v465
    %467 = vmatprep.subr.mxu0 0.0
    %v468 = vand.u32 %v29, 4294901760
    %469 = vmatpush1.msra.mxu0 %v468
    %470 = vmatprep.subr.mxu0 0.0
    %v471 = vand.u32 %v30, 4294901760
    %472 = vmatpush1.msra.mxu0 %v471
    %473 = vmatprep.subr.mxu0 0.0
    %474 = vmatpush1.msra.mxu0 0.0
    %475 = vmatprep.subr.mxu0 0.0
    %476 = vmatpush1.msra.mxu0 0.0
    %477 = vmatprep.subr.mxu0 0.0
    %478 = vmatpush1.msra.mxu0 0.0
    %479 = vmatprep.subr.mxu0 0.0
    %480 = vmatpush1.msra.mxu0 0.0
    %481 = vmatprep.subr.mxu0 0.0
    %482 = vmatpush1.msra.mxu0 0.0
    %483 = vmatprep.subr.mxu0 0.0
    %484 = vmatpush1.msra.mxu0 0.0
    %485 = vmatprep.subr.mxu0 0.0
    %486 = vmatpush1.msra.mxu0 0.0
    %487 = vmatprep.subr.mxu0 0.0
    %488 = vmatpush1.msra.mxu0 0.0
    %489 = vmatprep.subr.mxu0 0.0
    %490 = vmatpush1.msra.mxu0 0.0
    %491 = vmatprep.subr.mxu0 0.0
    %492 = vmatpush1.msra.mxu0 0.0
    %493 = vmatprep.subr.mxu0 0.0
    %494 = vmatpush1.msra.mxu0 0.0
    %495 = vmatprep.subr.mxu0 0.0
    %496 = vmatpush1.msra.mxu0 0.0
    %497 = vmatprep.subr.mxu0 0.0
    %498 = vmatpush1.msra.mxu0 0.0
    %499 = vmatprep.subr.mxu0 0.0
    %500 = vmatpush1.msra.mxu0 0.0
    %501 = vmatprep.subr.mxu0 0.0
    %502 = vmatpush1.msra.mxu0 0.0
    %503 = vmatprep.subr.mxu0 0.0
    %504 = vmatpush1.msra.mxu0 0.0
    %505 = vmatprep.subr.mxu0 0.0
    %506 = vmatpush1.msra.mxu0 0.0
    %507 = vmatprep.subr.mxu0 0.0
    %508 = vmatpush1.msra.mxu0 0.0
    %509 = vmatprep.subr.mxu0 0.0
    %510 = vmatpush1.msra.mxu0 0.0
    %511 = vmatprep.subr.mxu0 0.0
    %512 = vmatpush1.msra.mxu0 0.0
    %513 = vmatprep.subr.mxu0 0.0
    %514 = vmatpush1.msra.mxu0 0.0
    %515 = vmatprep.subr.mxu0 0.0
    %516 = vmatpush1.msra.mxu0 0.0
    %517 = vmatprep.subr.mxu0 0.0
    %518 = vmatpush1.msra.mxu0 0.0
    %519 = vmatprep.subr.mxu0 0.0
    %520 = vmatpush1.msra.mxu0 0.0
    %521 = vmatprep.subr.mxu0 0.0
    %522 = vmatpush1.msra.mxu0 0.0
    %523 = vmatprep.subr.mxu0 0.0
    %524 = vmatpush1.msra.mxu0 0.0
    %525 = vmatprep.subr.mxu0 0.0
    %526 = vmatpush1.msra.mxu0 0.0
    %527 = vmatprep.subr.mxu0 0.0
    %528 = vmatpush1.msra.mxu0 0.0
    %529 = vmatprep.mubr.f32.mxu0 0.0
    %v530 = vand.u32 %v49, 4294901760
    %531 = vmatmul.mubr.f32.gmra.mrb[0].mxu0 %v530
    %v532 = vpop.f32.mrb[0].mxu0
    %v533 = vadd.f32 %v458, %v532
    %v534 = vpop.f32.mrb[0].mxu0
    %535 = vdwg.mxu0
    %v536 = vmax.f32 %v533, 0.0
    %v538 = vlaneseq
    %v539 = vshrl.u32 %v538, 7
    %v540 = vsub.s32 0, %v539
    %v541 = vrot.slane %v40, %v540
    %vm543 = vcmask 523264
    %v545 = vsel %vm543, %v536, 0
    %547 = vmatprep.subr.mxu0 0.0
    %v548 = vand.u32 %v32, 4294901760
    %549 = vmatpush1.msra.mxu0 %v548
    %550 = vmatprep.subr.mxu0 0.0
    %v551 = vand.u32 %v33, 4294901760
    %552 = vmatpush1.msra.mxu0 %v551
    %553 = vmatprep.subr.mxu0 0.0
    %v554 = vand.u32 %v34, 4294901760
    %555 = vmatpush1.msra.mxu0 %v554
    %556 = vmatprep.subr.mxu0 0.0
    %v557 = vand.u32 %v35, 4294901760
    %558 = vmatpush1.msra.mxu0 %v557
    %559 = vmatprep.subr.mxu0 0.0
    %v560 = vand.u32 %v36, 4294901760
    %561 = vmatpush1.msra.mxu0 %v560
    %562 = vmatprep.subr.mxu0 0.0
    %v563 = vand.u32 %v37, 4294901760
    %564 = vmatpush1.msra.mxu0 %v563
    %565 = vmatprep.subr.mxu0 0.0
    %v566 = vand.u32 %v38, 4294901760
    %567 = vmatpush1.msra.mxu0 %v566
    %568 = vmatprep.subr.mxu0 0.0
    %v569 = vand.u32 %v39, 4294901760
    %570 = vmatpush1.msra.mxu0 %v569
    %571 = vmatprep.subr.mxu0 0.0
    %572 = vmatpush1.msra.mxu0 0.0
    %573 = vmatprep.subr.mxu0 0.0
    %574 = vmatpush1.msra.mxu0 0.0
    %575 = vmatprep.subr.mxu0 0.0
    %576 = vmatpush1.msra.mxu0 0.0
    %577 = vmatprep.subr.mxu0 0.0
    %578 = vmatpush1.msra.mxu0 0.0
    %579 = vmatprep.subr.mxu0 0.0
    %580 = vmatpush1.msra.mxu0 0.0
    %581 = vmatprep.subr.mxu0 0.0
    %582 = vmatpush1.msra.mxu0 0.0
    %583 = vmatprep.subr.mxu0 0.0
    %584 = vmatpush1.msra.mxu0 0.0
    %585 = vmatprep.subr.mxu0 0.0
    %586 = vmatpush1.msra.mxu0 0.0
    %587 = vmatprep.subr.mxu0 0.0
    %588 = vmatpush1.msra.mxu0 0.0
    %589 = vmatprep.subr.mxu0 0.0
    %590 = vmatpush1.msra.mxu0 0.0
    %591 = vmatprep.subr.mxu0 0.0
    %592 = vmatpush1.msra.mxu0 0.0
    %593 = vmatprep.subr.mxu0 0.0
    %594 = vmatpush1.msra.mxu0 0.0
    %595 = vmatprep.subr.mxu0 0.0
    %596 = vmatpush1.msra.mxu0 0.0
    %597 = vmatprep.subr.mxu0 0.0
    %598 = vmatpush1.msra.mxu0 0.0
    %599 = vmatprep.subr.mxu0 0.0
    %600 = vmatpush1.msra.mxu0 0.0
    %601 = vmatprep.subr.mxu0 0.0
    %602 = vmatpush1.msra.mxu0 0.0
    %603 = vmatprep.subr.mxu0 0.0
    %604 = vmatpush1.msra.mxu0 0.0
    %605 = vmatprep.subr.mxu0 0.0
    %606 = vmatpush1.msra.mxu0 0.0
    %607 = vmatprep.subr.mxu0 0.0
    %608 = vmatpush1.msra.mxu0 0.0
    %609 = vmatprep.subr.mxu0 0.0
    %610 = vmatpush1.msra.mxu0 0.0
    %611 = vmatprep.subr.mxu0 0.0
    %612 = vmatpush1.msra.mxu0 0.0
    %613 = vmatprep.subr.mxu0 0.0
    %614 = vmatpush1.msra.mxu0 0.0
    %615 = vmatprep.subr.mxu0 0.0
    %616 = vmatpush1.msra.mxu0 0.0
    %617 = vmatprep.subr.mxu0 0.0
    %618 = vmatpush1.msra.mxu0 0.0
    %619 = vmatprep.mubr.f32.mxu0 0.0
    %v620 = vand.u32 %v545, 4294901760
    %v621 = vsub.f32 %v545, %v620
    %v622 = vand.u32 %v621, 4294901760
    %v623 = vsub.f32 %v621, %v622
    %v624 = vand.u32 %v623, 4294901760
    %625 = vmatmul.mubr.f32.gmra.mrb[0].mxu0 %v624
    %v626 = vpop.f32.mrb[0].mxu0
    %v627 = vadd.f32 %v541, %v626
    %v628 = vpop.f32.mrb[0].mxu0
    %629 = vdwg.mxu0
    %630 = vmatprep.subr.mxu0 0.0
    %v631 = vand.u32 %v32, 4294901760
    %v632 = vsub.f32 %v32, %v631
    %v633 = vand.u32 %v632, 4294901760
    %v634 = vsub.f32 %v632, %v633
    %v635 = vand.u32 %v634, 4294901760
    %636 = vmatpush1.msra.mxu0 %v635
    %637 = vmatprep.subr.mxu0 0.0
    %v638 = vand.u32 %v33, 4294901760
    %v639 = vsub.f32 %v33, %v638
    %v640 = vand.u32 %v639, 4294901760
    %v641 = vsub.f32 %v639, %v640
    %v642 = vand.u32 %v641, 4294901760
    %643 = vmatpush1.msra.mxu0 %v642
    %644 = vmatprep.subr.mxu0 0.0
    %v645 = vand.u32 %v34, 4294901760
    %v646 = vsub.f32 %v34, %v645
    %v647 = vand.u32 %v646, 4294901760
    %v648 = vsub.f32 %v646, %v647
    %v649 = vand.u32 %v648, 4294901760
    %650 = vmatpush1.msra.mxu0 %v649
    %651 = vmatprep.subr.mxu0 0.0
    %v652 = vand.u32 %v35, 4294901760
    %v653 = vsub.f32 %v35, %v652
    %v654 = vand.u32 %v653, 4294901760
    %v655 = vsub.f32 %v653, %v654
    %v656 = vand.u32 %v655, 4294901760
    %657 = vmatpush1.msra.mxu0 %v656
    %658 = vmatprep.subr.mxu0 0.0
    %v659 = vand.u32 %v36, 4294901760
    %v660 = vsub.f32 %v36, %v659
    %v661 = vand.u32 %v660, 4294901760
    %v662 = vsub.f32 %v660, %v661
    %v663 = vand.u32 %v662, 4294901760
    %664 = vmatpush1.msra.mxu0 %v663
    %665 = vmatprep.subr.mxu0 0.0
    %v666 = vand.u32 %v37, 4294901760
    %v667 = vsub.f32 %v37, %v666
    %v668 = vand.u32 %v667, 4294901760
    %v669 = vsub.f32 %v667, %v668
    %v670 = vand.u32 %v669, 4294901760
    %671 = vmatpush1.msra.mxu0 %v670
    %672 = vmatprep.subr.mxu0 0.0
    %v673 = vand.u32 %v38, 4294901760
    %v674 = vsub.f32 %v38, %v673
    %v675 = vand.u32 %v674, 4294901760
    %v676 = vsub.f32 %v674, %v675
    %v677 = vand.u32 %v676, 4294901760
    %678 = vmatpush1.msra.mxu0 %v677
    %679 = vmatprep.subr.mxu0 0.0
    %v680 = vand.u32 %v39, 4294901760
    %v681 = vsub.f32 %v39, %v680
    %v682 = vand.u32 %v681, 4294901760
    %v683 = vsub.f32 %v681, %v682
    %v684 = vand.u32 %v683, 4294901760
    %685 = vmatpush1.msra.mxu0 %v684
    %686 = vmatprep.subr.mxu0 0.0
    %687 = vmatpush1.msra.mxu0 0.0
    %688 = vmatprep.subr.mxu0 0.0
    %689 = vmatpush1.msra.mxu0 0.0
    %690 = vmatprep.subr.mxu0 0.0
    %691 = vmatpush1.msra.mxu0 0.0
    %692 = vmatprep.subr.mxu0 0.0
    %693 = vmatpush1.msra.mxu0 0.0
    %694 = vmatprep.subr.mxu0 0.0
    %695 = vmatpush1.msra.mxu0 0.0
    %696 = vmatprep.subr.mxu0 0.0
    %697 = vmatpush1.msra.mxu0 0.0
    %698 = vmatprep.subr.mxu0 0.0
    %699 = vmatpush1.msra.mxu0 0.0
    %700 = vmatprep.subr.mxu0 0.0
    %701 = vmatpush1.msra.mxu0 0.0
    %702 = vmatprep.subr.mxu0 0.0
    %703 = vmatpush1.msra.mxu0 0.0
    %704 = vmatprep.subr.mxu0 0.0
    %705 = vmatpush1.msra.mxu0 0.0
    %706 = vmatprep.subr.mxu0 0.0
    %707 = vmatpush1.msra.mxu0 0.0
    %708 = vmatprep.subr.mxu0 0.0
    %709 = vmatpush1.msra.mxu0 0.0
    %710 = vmatprep.subr.mxu0 0.0
    %711 = vmatpush1.msra.mxu0 0.0
    %712 = vmatprep.subr.mxu0 0.0
    %713 = vmatpush1.msra.mxu0 0.0
    %714 = vmatprep.subr.mxu0 0.0
    %715 = vmatpush1.msra.mxu0 0.0
    %716 = vmatprep.subr.mxu0 0.0
    %717 = vmatpush1.msra.mxu0 0.0
    %718 = vmatprep.subr.mxu0 0.0
    %719 = vmatpush1.msra.mxu0 0.0
    %720 = vmatprep.subr.mxu0 0.0
    %721 = vmatpush1.msra.mxu0 0.0
    %722 = vmatprep.subr.mxu0 0.0
    %723 = vmatpush1.msra.mxu0 0.0
    %724 = vmatprep.subr.mxu0 0.0
    %725 = vmatpush1.msra.mxu0 0.0
    %726 = vmatprep.subr.mxu0 0.0
    %727 = vmatpush1.msra.mxu0 0.0
    %728 = vmatprep.subr.mxu0 0.0
    %729 = vmatpush1.msra.mxu0 0.0
    %730 = vmatprep.subr.mxu0 0.0
    %731 = vmatpush1.msra.mxu0 0.0
    %732 = vmatprep.subr.mxu0 0.0
    %733 = vmatpush1.msra.mxu0 0.0
    %734 = vmatprep.mubr.f32.mxu0 0.0
    %v735 = vand.u32 %v545, 4294901760
    %736 = vmatmul.mubr.f32.gmra.mrb[0].mxu0 %v735
    %v737 = vpop.f32.mrb[0].mxu0
    %v738 = vadd.f32 %v627, %v737
    %v739 = vpop.f32.mrb[0].mxu0
    %740 = vdwg.mxu0
    %741 = vmatprep.subr.mxu0 0.0
    %v742 = vand.u32 %v32, 4294901760
    %v743 = vsub.f32 %v32, %v742
    %744 = vmatpush1.msra.mxu0 %v743
    %745 = vmatprep.subr.mxu0 0.0
    %v746 = vand.u32 %v33, 4294901760
    %v747 = vsub.f32 %v33, %v746
    %748 = vmatpush1.msra.mxu0 %v747
    %749 = vmatprep.subr.mxu0 0.0
    %v750 = vand.u32 %v34, 4294901760
    %v751 = vsub.f32 %v34, %v750
    %752 = vmatpush1.msra.mxu0 %v751
    %753 = vmatprep.subr.mxu0 0.0
    %v754 = vand.u32 %v35, 4294901760
    %v755 = vsub.f32 %v35, %v754
    %756 = vmatpush1.msra.mxu0 %v755
    %757 = vmatprep.subr.mxu0 0.0
    %v758 = vand.u32 %v36, 4294901760
    %v759 = vsub.f32 %v36, %v758
    %760 = vmatpush1.msra.mxu0 %v759
    %761 = vmatprep.subr.mxu0 0.0
    %v762 = vand.u32 %v37, 4294901760
    %v763 = vsub.f32 %v37, %v762
    %764 = vmatpush1.msra.mxu0 %v763
    %765 = vmatprep.subr.mxu0 0.0
    %v766 = vand.u32 %v38, 4294901760
    %v767 = vsub.f32 %v38, %v766
    %768 = vmatpush1.msra.mxu0 %v767
    %769 = vmatprep.subr.mxu0 0.0
    %v770 = vand.u32 %v39, 4294901760
    %v771 = vsub.f32 %v39, %v770
    %772 = vmatpush1.msra.mxu0 %v771
    %773 = vmatprep.subr.mxu0 0.0
    %774 = vmatpush1.msra.mxu0 0.0
    %775 = vmatprep.subr.mxu0 0.0
    %776 = vmatpush1.msra.mxu0 0.0
    %777 = vmatprep.subr.mxu0 0.0
    %778 = vmatpush1.msra.mxu0 0.0
    %779 = vmatprep.subr.mxu0 0.0
    %780 = vmatpush1.msra.mxu0 0.0
    %781 = vmatprep.subr.mxu0 0.0
    %782 = vmatpush1.msra.mxu0 0.0
    %783 = vmatprep.subr.mxu0 0.0
    %784 = vmatpush1.msra.mxu0 0.0
    %785 = vmatprep.subr.mxu0 0.0
    %786 = vmatpush1.msra.mxu0 0.0
    %787 = vmatprep.subr.mxu0 0.0
    %788 = vmatpush1.msra.mxu0 0.0
    %789 = vmatprep.subr.mxu0 0.0
    %790 = vmatpush1.msra.mxu0 0.0
    %791 = vmatprep.subr.mxu0 0.0
    %792 = vmatpush1.msra.mxu0 0.0
    %793 = vmatprep.subr.mxu0 0.0
    %794 = vmatpush1.msra.mxu0 0.0
    %795 = vmatprep.subr.mxu0 0.0
    %796 = vmatpush1.msra.mxu0 0.0
    %797 = vmatprep.subr.mxu0 0.0
    %798 = vmatpush1.msra.mxu0 0.0
    %799 = vmatprep.subr.mxu0 0.0
    %800 = vmatpush1.msra.mxu0 0.0
    %801 = vmatprep.subr.mxu0 0.0
    %802 = vmatpush1.msra.mxu0 0.0
    %803 = vmatprep.subr.mxu0 0.0
    %804 = vmatpush1.msra.mxu0 0.0
    %805 = vmatprep.subr.mxu0 0.0
    %806 = vmatpush1.msra.mxu0 0.0
    %807 = vmatprep.subr.mxu0 0.0
    %808 = vmatpush1.msra.mxu0 0.0
    %809 = vmatprep.subr.mxu0 0.0
    %810 = vmatpush1.msra.mxu0 0.0
    %811 = vmatprep.subr.mxu0 0.0
    %812 = vmatpush1.msra.mxu0 0.0
    %813 = vmatprep.subr.mxu0 0.0
    %814 = vmatpush1.msra.mxu0 0.0
    %815 = vmatprep.subr.mxu0 0.0
    %816 = vmatpush1.msra.mxu0 0.0
    %817 = vmatprep.subr.mxu0 0.0
    %818 = vmatpush1.msra.mxu0 0.0
    %819 = vmatprep.subr.mxu0 0.0
    %820 = vmatpush1.msra.mxu0 0.0
    %821 = vmatprep.mubr.f32.mxu0 0.0
    %v822 = vand.u32 %v545, 4294901760
    %v823 = vsub.f32 %v545, %v822
    %824 = vmatmul.mubr.f32.gmra.mrb[0].mxu0 %v823
    %v825 = vpop.f32.mrb[0].mxu0
    %v826 = vadd.f32 %v738, %v825
    %v827 = vpop.f32.mrb[0].mxu0
    %828 = vdwg.mxu0
    %829 = vmatprep.subr.mxu0 0.0
    %v830 = vand.u32 %v32, 4294901760
    %831 = vmatpush1.msra.mxu0 %v830
    %832 = vmatprep.subr.mxu0 0.0
    %v833 = vand.u32 %v33, 4294901760
    %834 = vmatpush1.msra.mxu0 %v833
    %835 = vmatprep.subr.mxu0 0.0
    %v836 = vand.u32 %v34, 4294901760
    %837 = vmatpush1.msra.mxu0 %v836
    %838 = vmatprep.subr.mxu0 0.0
    %v839 = vand.u32 %v35, 4294901760
    %840 = vmatpush1.msra.mxu0 %v839
    %841 = vmatprep.subr.mxu0 0.0
    %v842 = vand.u32 %v36, 4294901760
    %843 = vmatpush1.msra.mxu0 %v842
    %844 = vmatprep.subr.mxu0 0.0
    %v845 = vand.u32 %v37, 4294901760
    %846 = vmatpush1.msra.mxu0 %v845
    %847 = vmatprep.subr.mxu0 0.0
    %v848 = vand.u32 %v38, 4294901760
    %849 = vmatpush1.msra.mxu0 %v848
    %850 = vmatprep.subr.mxu0 0.0
    %v851 = vand.u32 %v39, 4294901760
    %852 = vmatpush1.msra.mxu0 %v851
    %853 = vmatprep.subr.mxu0 0.0
    %854 = vmatpush1.msra.mxu0 0.0
    %855 = vmatprep.subr.mxu0 0.0
    %856 = vmatpush1.msra.mxu0 0.0
    %857 = vmatprep.subr.mxu0 0.0
    %858 = vmatpush1.msra.mxu0 0.0
    %859 = vmatprep.subr.mxu0 0.0
    %860 = vmatpush1.msra.mxu0 0.0
    %861 = vmatprep.subr.mxu0 0.0
    %862 = vmatpush1.msra.mxu0 0.0
    %863 = vmatprep.subr.mxu0 0.0
    %864 = vmatpush1.msra.mxu0 0.0
    %865 = vmatprep.subr.mxu0 0.0
    %866 = vmatpush1.msra.mxu0 0.0
    %867 = vmatprep.subr.mxu0 0.0
    %868 = vmatpush1.msra.mxu0 0.0
    %869 = vmatprep.subr.mxu0 0.0
    %870 = vmatpush1.msra.mxu0 0.0
    %871 = vmatprep.subr.mxu0 0.0
    %872 = vmatpush1.msra.mxu0 0.0
    %873 = vmatprep.subr.mxu0 0.0
    %874 = vmatpush1.msra.mxu0 0.0
    %875 = vmatprep.subr.mxu0 0.0
    %876 = vmatpush1.msra.mxu0 0.0
    %877 = vmatprep.subr.mxu0 0.0
    %878 = vmatpush1.msra.mxu0 0.0
    %879 = vmatprep.subr.mxu0 0.0
    %880 = vmatpush1.msra.mxu0 0.0
    %881 = vmatprep.subr.mxu0 0.0
    %882 = vmatpush1.msra.mxu0 0.0
    %883 = vmatprep.subr.mxu0 0.0
    %884 = vmatpush1.msra.mxu0 0.0
    %885 = vmatprep.subr.mxu0 0.0
    %886 = vmatpush1.msra.mxu0 0.0
    %887 = vmatprep.subr.mxu0 0.0
    %888 = vmatpush1.msra.mxu0 0.0
    %889 = vmatprep.subr.mxu0 0.0
    %890 = vmatpush1.msra.mxu0 0.0
    %891 = vmatprep.subr.mxu0 0.0
    %892 = vmatpush1.msra.mxu0 0.0
    %893 = vmatprep.subr.mxu0 0.0
    %894 = vmatpush1.msra.mxu0 0.0
    %895 = vmatprep.subr.mxu0 0.0
    %896 = vmatpush1.msra.mxu0 0.0
    %897 = vmatprep.subr.mxu0 0.0
    %898 = vmatpush1.msra.mxu0 0.0
    %899 = vmatprep.subr.mxu0 0.0
    %900 = vmatpush1.msra.mxu0 0.0
    %901 = vmatprep.mubr.f32.mxu0 0.0
    %v902 = vand.u32 %v545, 4294901760
    %v903 = vsub.f32 %v545, %v902
    %v904 = vand.u32 %v903, 4294901760
    %905 = vmatmul.mubr.f32.gmra.mrb[0].mxu0 %v904
    %v906 = vpop.f32.mrb[0].mxu0
    %v907 = vadd.f32 %v826, %v906
    %v908 = vpop.f32.mrb[0].mxu0
    %909 = vdwg.mxu0
    %910 = vmatprep.subr.mxu0 0.0
    %v911 = vand.u32 %v32, 4294901760
    %v912 = vsub.f32 %v32, %v911
    %v913 = vand.u32 %v912, 4294901760
    %914 = vmatpush1.msra.mxu0 %v913
    %915 = vmatprep.subr.mxu0 0.0
    %v916 = vand.u32 %v33, 4294901760
    %v917 = vsub.f32 %v33, %v916
    %v918 = vand.u32 %v917, 4294901760
    %919 = vmatpush1.msra.mxu0 %v918
    %920 = vmatprep.subr.mxu0 0.0
    %v921 = vand.u32 %v34, 4294901760
    %v922 = vsub.f32 %v34, %v921
    %v923 = vand.u32 %v922, 4294901760
    %924 = vmatpush1.msra.mxu0 %v923
    %925 = vmatprep.subr.mxu0 0.0
    %v926 = vand.u32 %v35, 4294901760
    %v927 = vsub.f32 %v35, %v926
    %v928 = vand.u32 %v927, 4294901760
    %929 = vmatpush1.msra.mxu0 %v928
    %930 = vmatprep.subr.mxu0 0.0
    %v931 = vand.u32 %v36, 4294901760
    %v932 = vsub.f32 %v36, %v931
    %v933 = vand.u32 %v932, 4294901760
    %934 = vmatpush1.msra.mxu0 %v933
    %935 = vmatprep.subr.mxu0 0.0
    %v936 = vand.u32 %v37, 4294901760
    %v937 = vsub.f32 %v37, %v936
    %v938 = vand.u32 %v937, 4294901760
    %939 = vmatpush1.msra.mxu0 %v938
    %940 = vmatprep.subr.mxu0 0.0
    %v941 = vand.u32 %v38, 4294901760
    %v942 = vsub.f32 %v38, %v941
    %v943 = vand.u32 %v942, 4294901760
    %944 = vmatpush1.msra.mxu0 %v943
    %945 = vmatprep.subr.mxu0 0.0
    %v946 = vand.u32 %v39, 4294901760
    %v947 = vsub.f32 %v39, %v946
    %v948 = vand.u32 %v947, 4294901760
    %949 = vmatpush1.msra.mxu0 %v948
    %950 = vmatprep.subr.mxu0 0.0
    %951 = vmatpush1.msra.mxu0 0.0
    %952 = vmatprep.subr.mxu0 0.0
    %953 = vmatpush1.msra.mxu0 0.0
    %954 = vmatprep.subr.mxu0 0.0
    %955 = vmatpush1.msra.mxu0 0.0
    %956 = vmatprep.subr.mxu0 0.0
    %957 = vmatpush1.msra.mxu0 0.0
    %958 = vmatprep.subr.mxu0 0.0
    %959 = vmatpush1.msra.mxu0 0.0
    %960 = vmatprep.subr.mxu0 0.0
    %961 = vmatpush1.msra.mxu0 0.0
    %962 = vmatprep.subr.mxu0 0.0
    %963 = vmatpush1.msra.mxu0 0.0
    %964 = vmatprep.subr.mxu0 0.0
    %965 = vmatpush1.msra.mxu0 0.0
    %966 = vmatprep.subr.mxu0 0.0
    %967 = vmatpush1.msra.mxu0 0.0
    %968 = vmatprep.subr.mxu0 0.0
    %969 = vmatpush1.msra.mxu0 0.0
    %970 = vmatprep.subr.mxu0 0.0
    %971 = vmatpush1.msra.mxu0 0.0
    %972 = vmatprep.subr.mxu0 0.0
    %973 = vmatpush1.msra.mxu0 0.0
    %974 = vmatprep.subr.mxu0 0.0
    %975 = vmatpush1.msra.mxu0 0.0
    %976 = vmatprep.subr.mxu0 0.0
    %977 = vmatpush1.msra.mxu0 0.0
    %978 = vmatprep.subr.mxu0 0.0
    %979 = vmatpush1.msra.mxu0 0.0
    %980 = vmatprep.subr.mxu0 0.0
    %981 = vmatpush1.msra.mxu0 0.0
    %982 = vmatprep.subr.mxu0 0.0
    %983 = vmatpush1.msra.mxu0 0.0
    %984 = vmatprep.subr.mxu0 0.0
    %985 = vmatpush1.msra.mxu0 0.0
    %986 = vmatprep.subr.mxu0 0.0
    %987 = vmatpush1.msra.mxu0 0.0
    %988 = vmatprep.subr.mxu0 0.0
    %989 = vmatpush1.msra.mxu0 0.0
    %990 = vmatprep.subr.mxu0 0.0
    %991 = vmatpush1.msra.mxu0 0.0
    %992 = vmatprep.subr.mxu0 0.0
    %993 = vmatpush1.msra.mxu0 0.0
    %994 = vmatprep.subr.mxu0 0.0
    %995 = vmatpush1.msra.mxu0 0.0
    %996 = vmatprep.subr.mxu0 0.0
    %997 = vmatpush1.msra.mxu0 0.0
    %998 = vmatprep.mubr.f32.mxu0 0.0
    %v999 = vand.u32 %v545, 4294901760
    %1000 = vmatmul.mubr.f32.gmra.mrb[0].mxu0 %v999
    %v1001 = vpop.f32.mrb[0].mxu0
    %v1002 = vadd.f32 %v907, %v1001
    %v1003 = vpop.f32.mrb[0].mxu0
    %1004 = vdwg.mxu0
    %1005 = vmatprep.subr.mxu0 0.0
    %v1006 = vand.u32 %v32, 4294901760
    %1007 = vmatpush1.msra.mxu0 %v1006
    %1008 = vmatprep.subr.mxu0 0.0
    %v1009 = vand.u32 %v33, 4294901760
    %1010 = vmatpush1.msra.mxu0 %v1009
    %1011 = vmatprep.subr.mxu0 0.0
    %v1012 = vand.u32 %v34, 4294901760
    %1013 = vmatpush1.msra.mxu0 %v1012
    %1014 = vmatprep.subr.mxu0 0.0
    %v1015 = vand.u32 %v35, 4294901760
    %1016 = vmatpush1.msra.mxu0 %v1015
    %1017 = vmatprep.subr.mxu0 0.0
    %v1018 = vand.u32 %v36, 4294901760
    %1019 = vmatpush1.msra.mxu0 %v1018
    %1020 = vmatprep.subr.mxu0 0.0
    %v1021 = vand.u32 %v37, 4294901760
    %1022 = vmatpush1.msra.mxu0 %v1021
    %1023 = vmatprep.subr.mxu0 0.0
    %v1024 = vand.u32 %v38, 4294901760
    %1025 = vmatpush1.msra.mxu0 %v1024
    %1026 = vmatprep.subr.mxu0 0.0
    %v1027 = vand.u32 %v39, 4294901760
    %1028 = vmatpush1.msra.mxu0 %v1027
    %1029 = vmatprep.subr.mxu0 0.0
    %1030 = vmatpush1.msra.mxu0 0.0
    %1031 = vmatprep.subr.mxu0 0.0
    %1032 = vmatpush1.msra.mxu0 0.0
    %1033 = vmatprep.subr.mxu0 0.0
    %1034 = vmatpush1.msra.mxu0 0.0
    %1035 = vmatprep.subr.mxu0 0.0
    %1036 = vmatpush1.msra.mxu0 0.0
    %1037 = vmatprep.subr.mxu0 0.0
    %1038 = vmatpush1.msra.mxu0 0.0
    %1039 = vmatprep.subr.mxu0 0.0
    %1040 = vmatpush1.msra.mxu0 0.0
    %1041 = vmatprep.subr.mxu0 0.0
    %1042 = vmatpush1.msra.mxu0 0.0
    %1043 = vmatprep.subr.mxu0 0.0
    %1044 = vmatpush1.msra.mxu0 0.0
    %1045 = vmatprep.subr.mxu0 0.0
    %1046 = vmatpush1.msra.mxu0 0.0
    %1047 = vmatprep.subr.mxu0 0.0
    %1048 = vmatpush1.msra.mxu0 0.0
    %1049 = vmatprep.subr.mxu0 0.0
    %1050 = vmatpush1.msra.mxu0 0.0
    %1051 = vmatprep.subr.mxu0 0.0
    %1052 = vmatpush1.msra.mxu0 0.0
    %1053 = vmatprep.subr.mxu0 0.0
    %1054 = vmatpush1.msra.mxu0 0.0
    %1055 = vmatprep.subr.mxu0 0.0
    %1056 = vmatpush1.msra.mxu0 0.0
    %1057 = vmatprep.subr.mxu0 0.0
    %1058 = vmatpush1.msra.mxu0 0.0
    %1059 = vmatprep.subr.mxu0 0.0
    %1060 = vmatpush1.msra.mxu0 0.0
    %1061 = vmatprep.subr.mxu0 0.0
    %1062 = vmatpush1.msra.mxu0 0.0
    %1063 = vmatprep.subr.mxu0 0.0
    %1064 = vmatpush1.msra.mxu0 0.0
    %1065 = vmatprep.subr.mxu0 0.0
    %1066 = vmatpush1.msra.mxu0 0.0
    %1067 = vmatprep.subr.mxu0 0.0
    %1068 = vmatpush1.msra.mxu0 0.0
    %1069 = vmatprep.subr.mxu0 0.0
    %1070 = vmatpush1.msra.mxu0 0.0
    %1071 = vmatprep.subr.mxu0 0.0
    %1072 = vmatpush1.msra.mxu0 0.0
    %1073 = vmatprep.subr.mxu0 0.0
    %1074 = vmatpush1.msra.mxu0 0.0
    %1075 = vmatprep.subr.mxu0 0.0
    %1076 = vmatpush1.msra.mxu0 0.0
    %1077 = vmatprep.mubr.f32.mxu0 0.0
    %v1078 = vand.u32 %v545, 4294901760
    %1079 = vmatmul.mubr.f32.gmra.mrb[0].mxu0 %v1078
    %v1080 = vpop.f32.mrb[0].mxu0
    %v1081 = vadd.f32 %v1002, %v1080
    %v1082 = vpop.f32.mrb[0].mxu0
    %1083 = vdwg.mxu0
    %vm1084 = vcmask 164864
    %v1085 = vsel %vm1084, %v1081, -inf
    %1086 = vmax.xlane.f32.xlu0 %v1085
    %v1087 = vpop.xlane.xlu0 %1086
    %v1088 = vsub.f32 %v1081, %v1087
    %v1089 = vmul.f32 %v1088, 1.442695
    %v1090 = vpow.pop %v1089
    %v1091 = vsel %vm1084, %v1090, 0.0
    %1092 = vadd.xlane.f32.xlu0 %v1091
    %v1093 = vpop.xlane.xlu0 %1092
    %v1094 = vrcp.pop %v1093
    %v1095 = vmul.f32 %v1090, %v1094
    %1096 = vst.msk [vmem:[#allocation2] sm:$0x3] %vm1084, %v1095
    %v1097 = vld [vmem:[%s5] sm:$0xff]
    %v1098 = vld [vmem:[%s5 + $0x8] sm:$0xff]
    %v1099 = vld [vmem:[%s5 + $0x10] sm:$0x1f]
    %v1100 = vld [vmem:[%s5 + $0x18] sm:$0xff]
    %v1101 = vld [vmem:[%s5 + $0x20] sm:$0xff]
    %v1102 = vld [vmem:[%s5 + $0x28] sm:$0x1f]
    %v1103 = vlaneseq
    %v1104 = vshrl.u32 %v1103, 7
    %v1105 = vsub.s32 0, %v1104
    %v1106 = vrot.slane %v1095, %v1105
    %1108 = vbcast.lane.b32.xlu0 %v1106, 256
    %v1109 = vpop.permute.xlu0 %1108
    %s1111 = sor.u32 256, 8
    %1112 = vbcast.lane.b32.xlu0 %v1106, %s1111
    %v1113 = vpop.permute.xlu0 %1112
    %s1115 = sor.u32 256, 16
    %1116 = vbcast.lane.b32.xlu0 %v1106, %s1115
    %v1117 = vpop.permute.xlu0 %1116
    %v1118 = vlaneseq
    %v1119 = vshrl.u32 %v1118, 7
    %v1120 = vsub.s32 1, %v1119
    %v1121 = vrot.slane %v1095, %v1120
    %1123 = vbcast.lane.b32.xlu0 %v1121, 256
    %v1124 = vpop.permute.xlu0 %1123
    %s1126 = sor.u32 256, 8
    %1127 = vbcast.lane.b32.xlu0 %v1121, %s1126
    %v1128 = vpop.permute.xlu0 %1127
    %s1130 = sor.u32 256, 16
    %1131 = vbcast.lane.b32.xlu0 %v1121, %s1130
    %v1132 = vpop.permute.xlu0 %1131
    %v1133 = vmul.f32 %v1097, %v1109
    %v1134 = vmul.f32 %v1098, %v1113
    %v1135 = vmul.f32 %v1099, %v1117
    %v1136 = vmul.f32 %v1100, %v1124
    %v1137 = vmul.f32 %v1101, %v1128
    %v1138 = vmul.f32 %v1102, %v1132
    %1139 = vst.msk [vmem:[%s6] sm:$0xff] %vm543, %v1133
    %1140 = vst.msk [vmem:[%s6 + $0x8] sm:$0xff] %vm543, %v1134
    %vm1141 = vcmask 520192
    %1142 = vst.msk [vmem:[%s6 + $0x10] sm:$0x1f] %vm1141, %v1135
    %1143 = vst.msk [vmem:[%s6 + $0x18] sm:$0xff] %vm543, %v1136
    %1144 = vst.msk [vmem:[%s6 + $0x20] sm:$0xff] %vm543, %v1137
    %1145 = vst.msk [vmem:[%s6 + $0x28] sm:$0x1f] %vm1141, %v1138
    // Predicated region
    $region26: #{tpu_custom_call.1} parent=1 // pred_check
      _
    $region27: #{tpu_custom_call.1} parent=1 // pred_check_branch
      %1147 = sbr.rel (0) target = $region29
    $region28: #{tpu_custom_call.1} parent=1 // pred_region
      _
    $region29: #{tpu_custom_call.1} parent=1 // pred_fallthru
      _
    // Predicated region
    $region30: #{tpu_custom_call.1} parent=1 // pred_check
      _
    $region31: #{tpu_custom_call.1} parent=1 // pred_check_branch
      %1149 = sbr.rel (0) target = $region33
    $region32: #{tpu_custom_call.1} parent=1 // pred_region
      %s1151 = ssub.s32 32, 32
      %1152 = vsyncadd [#allocation3], %s1151
      %s1154 = sshll.u32 [#allocation2], 4
      %s1155 = int_to_ptr.vmem [resolvable:$true] %s1154
      %1157 = dma.vmem_to_hbm [thread:$0]  %s1155, 32, %s7, [#allocation3]
    $region33: #{tpu_custom_call.1} parent=1 // pred_fallthru
      _
    // Predicated region
    $region34: #{tpu_custom_call.1} parent=1 // pred_check
      _
    $region35: #{tpu_custom_call.1} parent=1 // pred_check_branch
      %1159 = sbr.rel (0) target = $region37
    $region36: #{tpu_custom_call.1} parent=1 // pred_region
      _
    $region37: #{tpu_custom_call.1} parent=1 // pred_fallthru
      _
    // Predicated region
    $region38: #{tpu_custom_call.1} parent=1 // pred_check
      _
    $region39: #{tpu_custom_call.1} parent=1 // pred_check_branch
      %1161 = sbr.rel (0) target = $region41
    $region40: #{tpu_custom_call.1} parent=1 // pred_region
      %1162 = dma.done [#allocation3], 32
    $region41: #{tpu_custom_call.1} parent=1 // pred_fallthru
      _
    %1163 = vsyncpa [#allocation3], 1

</llo_original>
